<compile_context>
chip_gen: v7x
topology: tpu7x:2x2x1
jax: 0.10.0
libtpu: 0.0.40
codegen_flags: <defaults>
</compile_context>

<pallas_src>
import math

import jax
import jax.numpy as jnp
from jax.experimental import pallas as pl
from jax.experimental.pallas import tpu as pltpu

NUM_JOINTS = 15
INPUT_DIM = (NUM_JOINTS + 1) * 6 + 3      # 99
POSE_LATENT_DIM = (NUM_JOINTS + 1) * 3    # 48
LATENT_DIM = 128
HAND_EMB = POSE_LATENT_DIM + 3            # 51
FUSED_IN = 2 * INPUT_DIM                  # 198

# ~rows (= bs*tq) per grid step.  2048 rows => ~2.6 MiB (f32 x + out) per step,
# ~5.2 MiB double-buffered: fits v5e's 16 MiB default scoped VMEM with headroom.
ROWS_PER_STEP = 2048


def _round_up(a, b):
    return ((a + b - 1) // b) * b


def _cdiv(a, b):
    return -(-a // b)


# ----------------------------------------------------------------------------- kernel
def _fused_affine_kernel(x_ref, w_ref, b_ref, o_ref):
    """One seq tile:  out[t, b, :] = x[b, t, :] @ W_fused + b_fused.

    x_ref: (bs, tq, 198)   all batch rows of one seq tile
    w_ref: (198, 128)      fused weight (grid-resident)
    b_ref: (1, 128)        fused bias, f32 (grid-resident)
    o_ref: (tq, bs, 128)   permuted output tile -> (seqlen, bs, latent) overall

    The bs->sublane strided stores fold the module's permute(1,0,2) into the
    kernel; they are cheap VMEM traffic fully hidden under the HBM DMA.
    """
    w = w_ref[...]
    bias = b_ref[...]                                  # f32 (1, 128)
    nb = x_ref.shape[0]
    for b in range(nb):                                # static unroll over (small) batch dim
        y = jnp.dot(x_ref[b], w, preferred_element_type=jnp.float32) + bias
        o_ref[:, b, :] = y.astype(o_ref.dtype)


# ----------------------------------------------------------------------------- params
def init_params(key):
    """Deterministic parameter init (same shapes as the PyTorch module, stored (in, out))."""
    ks = jax.random.split(key, 6)

    def linear(kw, kb, fan_in, fan_out):
        bound = 1.0 / math.sqrt(fan_in)
        w = jax.random.uniform(kw, (fan_in, fan_out), jnp.float32, -bound, bound)
        b = jax.random.uniform(kb, (fan_out,), jnp.float32, -bound, bound)
        return w, b

    wt, bt = linear(ks[0], ks[1], 3, 3)                             # transEmbedding
    wp, bp = linear(ks[2], ks[3], INPUT_DIM - 3, POSE_LATENT_DIM)   # poseEmbedding
    wm, bm = linear(ks[4], ks[5], 2 * HAND_EMB, LATENT_DIM)         # multiHandEmbedding
    return dict(wt=wt, bt=bt, wp=wp, bp=bp, wm=wm, bm=bm)


def fuse_params(params):
    """Exact composition of the three Linear layers into one affine map (198 -> 128)."""
    wt, bt = params["wt"], params["bt"]
    wp, bp = params["wp"], params["bp"]
    wm, bm = params["wm"], params["bm"]
    hp = jax.lax.Precision.HIGHEST

    wm_t1 = wm[0:3]
    wm_p1 = wm[3:HAND_EMB]
    wm_t2 = wm[HAND_EMB:HAND_EMB + 3]
    wm_p2 = wm[HAND_EMB + 3:2 * HAND_EMB]

    w_fused = jnp.concatenate(
        [
            jnp.dot(wt, wm_t1, precision=hp),   # rows 0:3     (trans, hand 1)
            jnp.dot(wp, wm_p1, precision=hp),   # rows 3:99    (pose,  hand 1)
            jnp.dot(wt, wm_t2, precision=hp),   # rows 99:102  (trans, hand 2)
            jnp.dot(wp, wm_p2, precision=hp),   # rows 102:198 (pose,  hand 2)
        ],
        axis=0,
    )                                           # (198, 128)
    b_fused = (
        jnp.dot(bt, wm_t1, precision=hp)
        + jnp.dot(bp, wm_p1, precision=hp)
        + jnp.dot(bt, wm_t2, precision=hp)
        + jnp.dot(bp, wm_p2, precision=hp)
        + bm
    ).reshape(1, LATENT_DIM)
    return w_fused.astype(jnp.float32), b_fused.astype(jnp.float32)


# ----------------------------------------------------------------------------- wrapper
def _choose_tq(bs, seqlen, rows_per_step):
    """Seq-tile size: ~rows_per_step rows per step, >=2 steps when there is enough work."""
    tq = _round_up(max(_cdiv(rows_per_step, bs), 1), 8)
    tq = min(tq, _round_up(seqlen, 8))
    # v7x has 2 TensorCores; the "parallel" grid axis shards steps across them.
    # Keep >= 2 grid steps once the total work is large enough to amortize the
    # ~0.35 us per-step overhead.
    if bs * seqlen >= 2 * rows_per_step and _cdiv(seqlen, tq) < 2:
        tq = _round_up(_cdiv(seqlen, 2), 8)
    return tq


def input_process_handpose(x, w_fused, b_fused, rows_per_step=ROWS_PER_STEP):
    """Forward of InputProcess_HandPose as a single fused Pallas matmul.

    x: (bs, seqlen, 2*INPUT_DIM) or (bs, seqlen, 2, INPUT_DIM), f32 or bf16.
    Returns (seqlen, bs, LATENT_DIM) in x's dtype (permute folded into the kernel).
    """
    if x.ndim == 4:                                   # (bs, seqlen, 2, input_dim)
        x = x.reshape(x.shape[0], x.shape[1], -1)
    bs, seqlen, inp_dim = x.shape
    assert inp_dim == FUSED_IN, f"Input dimension mismatch. Expected {FUSED_IN}, got {inp_dim}"

    # Consume x in its native dtype; weight follows x (tiny), bias & accumulation f32.
    w = w_fused.astype(x.dtype)
    b = b_fused.astype(jnp.float32).reshape(1, LATENT_DIM)

    tq = _choose_tq(bs, seqlen, rows_per_step)
    grid = (_cdiv(seqlen, tq),)                       # ragged seq tail masked by Pallas

    return pl.pallas_call(
        _fused_affine_kernel,
        out_shape=jax.ShapeDtypeStruct((seqlen, bs, LATENT_DIM), x.dtype),
        grid=grid,
        in_specs=[
            pl.BlockSpec((bs, tq, FUSED_IN), lambda s: (0, s, 0)),       # x: one seq tile, all batch
            pl.BlockSpec((FUSED_IN, LATENT_DIM), lambda s: (0, 0)),      # fused weight (resident)
            pl.BlockSpec((1, LATENT_DIM), lambda s: (0, 0)),             # fused bias (resident)
        ],
        out_specs=pl.BlockSpec((tq, bs, LATENT_DIM), lambda s: (s, 0, 0)),  # permuted output
        compiler_params=pltpu.CompilerParams(dimension_semantics=("parallel",)),
    )(x, w, b)


def make_input_process_handpose(params):
    """Fuse the three Linear layers ONCE; returns a forward fn (fusion hoisted out of per-call path)."""
    w_fused, b_fused = jax.block_until_ready(fuse_params(params))

    def forward(x, rows_per_step=ROWS_PER_STEP):
        return input_process_handpose(x, w_fused, b_fused, rows_per_step=rows_per_step)

    return forward


# ----------------------------------------------------------------------------- reference
def reference(x, params):
    """Pure-JAX mirror of the PyTorch forward (f32, HIGHEST precision), for verification."""
    if x.ndim == 4:
        x = x.reshape(x.shape[0], x.shape[1], -1)
    x = jnp.transpose(x.astype(jnp.float32), (1, 0, 2))
    hp = jax.lax.Precision.HIGHEST
    h1, h2 = x[..., :INPUT_DIM], x[..., INPUT_DIM:]

    def hand(h):
        te = jnp.dot(h[..., :3], params["wt"], precision=hp) + params["bt"]
        pe = jnp.dot(h[..., 3:], params["wp"], precision=hp) + params["bp"]
        return jnp.concatenate([te, pe], axis=-1)

    he = jnp.concatenate([hand(h1), hand(h2)], axis=-1)
    return jnp.dot(he, params["wm"], precision=hp) + params["bm"]


# ----------------------------------------------------------------------------- tests
if __name__ == "__main__":
    key = jax.random.PRNGKey(0)
    k_param, k1, k2, k3, k4 = jax.random.split(key, 5)

    params = init_params(k_param)
    forward = make_input_process_handpose(params)     # fusion done once, outside the call path

    # 1) small 3-D input (bs, seqlen, 2*input_dim)
    bs, seqlen = 2, 8
    x = jax.random.normal(k1, (bs, seqlen, 2 * INPUT_DIM), dtype=jnp.float32)
    out = jax.block_until_ready(forward(x))
    ref = reference(x, params)
    assert out.shape == (seqlen, bs, LATENT_DIM), out.shape
    assert jnp.allclose(out, ref, atol=1e-4, rtol=1e-4), float(jnp.max(jnp.abs(out - ref)))

    # 2) 4-D input path (bs, seqlen, 2, input_dim)
    x4 = jax.random.normal(k2, (bs, seqlen, 2, INPUT_DIM), dtype=jnp.float32)
    out4 = jax.block_until_ready(forward(x4))
    ref4 = reference(x4, params)
    assert out4.shape == (seqlen, bs, LATENT_DIM), out4.shape
    assert jnp.allclose(out4, ref4, atol=1e-4, rtol=1e-4), float(jnp.max(jnp.abs(out4 - ref4)))

    # 3) multi-step grid + ragged seq tail (tiny forced tiles: tq=16, 5 steps, tail of 13)
    bs3, seq3 = 2, 77
    x3 = jax.random.normal(k3, (bs3, seq3, 2 * INPUT_DIM), dtype=jnp.float32)
    out3 = jax.block_until_ready(forward(x3, rows_per_step=32))
    ref3 = reference(x3, params)
    assert out3.shape == (seq3, bs3, LATENT_DIM), out3.shape
    assert jnp.allclose(out3, ref3, atol=1e-4, rtol=1e-4), float(jnp.max(jnp.abs(out3 - ref3)))

    # 4) default tile config: bs=8, seqlen=300 -> tq=256, 2-step grid with a ragged tail
    bs4, seq4 = 8, 300
    x4b = jax.random.normal(k4, (bs4, seq4, 2 * INPUT_DIM), dtype=jnp.float32)
    out4b = jax.block_until_ready(forward(x4b))
    ref4b = reference(x4b, params)
    assert out4b.shape == (seq4, bs4, LATENT_DIM), out4b.shape
    assert jnp.allclose(out4b, ref4b, atol=1e-4, rtol=1e-4), float(jnp.max(jnp.abs(out4b - ref4b)))

    # 5) bf16 input/output path (f32 accumulation inside the kernel)
    xb = x.astype(jnp.bfloat16)
    outb = jax.block_until_ready(forward(xb))
    refb = reference(xb, params)                      # reference up-casts the same quantized input
    assert outb.dtype == jnp.bfloat16, outb.dtype
    diff = jnp.abs(outb.astype(jnp.float32) - refb)
    assert jnp.allclose(outb.astype(jnp.float32), refb, atol=3e-2, rtol=3e-2), float(jnp.max(diff))

    print("KERNEL_OK")
</pallas_src>

<mosaic_0001>
module attributes {stable_mosaic.version = 11 : i64} {
  func.func @_fused_affine_kernel(%arg0: i32, %arg1: memref<2x8x198xf32, #tpu.memory_space<vmem>>, %arg2: memref<198x128xf32, #tpu.memory_space<vmem>>, %arg3: memref<1x128xf32, #tpu.memory_space<vmem>>, %arg4: memref<8x2x128xf32, #tpu.memory_space<vmem>>) attributes {dimension_semantics = [#tpu.dimension_semantics<parallel>], iteration_bounds = array<i64: 1>, scalar_prefetch = 0 : i64, scratch_operands = 0 : i64, tpu.core_type = #tpu.core_type<tc>, window_params = [{transform_indices = @transform_0, window_bounds = array<i64: 2, 8, 198>}, {pipeline_mode = #tpu.pipeline_mode<synchronous>, transform_indices = @transform_1, window_bounds = array<i64: 198, 128>}, {pipeline_mode = #tpu.pipeline_mode<synchronous>, transform_indices = @transform_2, window_bounds = array<i64: 1, 128>}, {transform_indices = @transform_3, window_bounds = array<i64: 8, 2, 128>}]} {
    %c0 = arith.constant 0 : index
    %c0_0 = arith.constant 0 : index
    %0 = vector.load %arg2[%c0, %c0_0] : memref<198x128xf32, #tpu.memory_space<vmem>>, vector<198x128xf32>
    %c0_1 = arith.constant 0 : index
    %c0_2 = arith.constant 0 : index
    %1 = vector.load %arg3[%c0_1, %c0_2] : memref<1x128xf32, #tpu.memory_space<vmem>>, vector<1x128xf32>
    %c0_3 = arith.constant 0 : index
    %c0_4 = arith.constant 0 : index
    %c0_5 = arith.constant 0 : index
    %2 = vector.load %arg1[%c0_3, %c0_4, %c0_5] : memref<2x8x198xf32, #tpu.memory_space<vmem>>, vector<1x8x198xf32>
    %3 = vector.shape_cast %2 : vector<1x8x198xf32> to vector<8x198xf32>
    %cst = arith.constant dense<0.000000e+00> : vector<8x128xf32>
    %4 = tpu.matmul %3, %0, %cst {dimension_numbers = #tpu.dot_dimension_numbers<[1], [0], [0], [1], [0, 0, 1, 1], [], []>} : vector<8x198xf32>, vector<198x128xf32>, vector<8x128xf32> -> vector<8x128xf32>
    %5 = vector.broadcast %1 : vector<1x128xf32> to vector<8x128xf32>
    %6 = arith.addf %4, %5 : vector<8x128xf32>
    %c0_6 = arith.constant 0 : index
    %c0_7 = arith.constant 0 : index
    %c0_8 = arith.constant 0 : index
    %7 = vector.load %arg4[%c0_6, %c0_7, %c0_8] : memref<8x2x128xf32, #tpu.memory_space<vmem>>, vector<8x1x128xf32>
    %8 = vector.shape_cast %7 : vector<8x1x128xf32> to vector<8x128xf32>
    %9 = vector.shape_cast %6 : vector<8x128xf32> to vector<8x1x128xf32>
    tpu.vector_store %arg4[%c0_6, %c0_7, %c0_8], %9 {strides = array<i32>} : memref<8x2x128xf32, #tpu.memory_space<vmem>>, vector<8x1x128xf32>,
    %c1 = arith.constant 1 : index
    %c0_9 = arith.constant 0 : index
    %c0_10 = arith.constant 0 : index
    %10 = vector.load %arg1[%c1, %c0_9, %c0_10] : memref<2x8x198xf32, #tpu.memory_space<vmem>>, vector<1x8x198xf32>
    %11 = vector.shape_cast %10 : vector<1x8x198xf32> to vector<8x198xf32>
    %cst_11 = arith.constant dense<0.000000e+00> : vector<8x128xf32>
    %12 = tpu.matmul %11, %0, %cst_11 {dimension_numbers = #tpu.dot_dimension_numbers<[1], [0], [0], [1], [0, 0, 1, 1], [], []>} : vector<8x198xf32>, vector<198x128xf32>, vector<8x128xf32> -> vector<8x128xf32>
    %13 = vector.broadcast %1 : vector<1x128xf32> to vector<8x128xf32>
    %14 = arith.addf %12, %13 : vector<8x128xf32>
    %c0_12 = arith.constant 0 : index
    %c1_13 = arith.constant 1 : index
    %c0_14 = arith.constant 0 : index
    %15 = vector.load %arg4[%c0_12, %c1_13, %c0_14] : memref<8x2x128xf32, #tpu.memory_space<vmem>>, vector<8x1x128xf32>
    %16 = vector.shape_cast %15 : vector<8x1x128xf32> to vector<8x128xf32>
    %17 = vector.shape_cast %14 : vector<8x128xf32> to vector<8x1x128xf32>
    tpu.vector_store %arg4[%c0_12, %c1_13, %c0_14], %17 {strides = array<i32>} : memref<8x2x128xf32, #tpu.memory_space<vmem>>, vector<8x1x128xf32>,
    return
  }
  func.func @transform_0(%arg0: i32) -> (i32, i32, i32) {
    %c0_i32 = arith.constant 0 : i32
    %c0_i32_0 = arith.constant 0 : i32
    %c0_i32_1 = arith.constant 0 : i32
    return %c0_i32, %arg0, %c0_i32_0 : i32, i32, i32
  }
  func.func @transform_1(%arg0: i32) -> (i32, i32) {
    %c0_i32 = arith.constant 0 : i32
    %c0_i32_0 = arith.constant 0 : i32
    %c0_i32_1 = arith.constant 0 : i32
    return %c0_i32, %c0_i32_0 : i32, i32
  }
  func.func @transform_2(%arg0: i32) -> (i32, i32) {
    %c0_i32 = arith.constant 0 : i32
    %c0_i32_0 = arith.constant 0 : i32
    %c0_i32_1 = arith.constant 0 : i32
    return %c0_i32, %c0_i32_0 : i32, i32
  }
  func.func @transform_3(%arg0: i32) -> (i32, i32, i32) {
    %c0_i32 = arith.constant 0 : i32
    %c0_i32_0 = arith.constant 0 : i32
    %c0_i32_1 = arith.constant 0 : i32
    return %arg0, %c0_i32, %c0_i32_0 : i32, i32, i32
  }
}

</mosaic_0001>

<llo_original>
// kernel: tpu_custom_call.1
$region0: #{tpu_custom_call.1}
  #allocation0 [shape = 'u32[]', space=smem, size = 0x4, offset = 0x4, fixed_abs, tag = 'smem constant byte address 0x4 - core index']
  #allocation1 [shape = 'u32[144,128]{1,0:T(1,128)}', space=vmem, size = 0x12000, scoped, tag = 'internal scratch']
  %s0 = inlined_call_operand.hbm [shape: f32[2,8,198], index: 0, kind: input, shape index: {}]
  %s1 = inlined_call_operand.hbm [shape: f32[198,128], index: 1, kind: input, shape index: {}]
  %s2 = inlined_call_operand.vmem [shape: f32[1,128], index: 2, kind: input, shape index: {}]
  %s3 = inlined_call_operand.hbm [shape: f32[8,2,128], index: 3, kind: output, shape index: {}]
  %s4 = sld [smem:[#allocation0]]
  $region30: #{tpu_custom_call.1} parent=0
    _
  %s6 = ssub.s32 1, %s4
  %s7 = scalar_select 0, %s6, %s4
  $region1: #{tpu_custom_call.1} parent=0
    #allocation2 [shape = 'u8[16384]{0}', space=vmem, size = 0x4000, scoped, tag = 'input window, operand 0, single buffered']
    #allocation3 [shape = 's32[1]{0}', space=sflag, size = 0x4, scoped, tag = 'scoped memory for tpu_custom_call.1']
    #allocation4 [shape = 's32[1]{0}', space=sflag, size = 0x4, scoped, tag = 'scoped memory for tpu_custom_call.1']
    #allocation5 [shape = 'u8[102400]{0}', space=vmem, size = 0x19000, scoped, tag = 'input window, operand 1, single buffered']
    #allocation6 [shape = 's32[1]{0}', space=sflag, size = 0x4, scoped, tag = 'scoped memory for tpu_custom_call.1']
    #allocation7 [shape = 'u8[8192]{0}', space=vmem, size = 0x2000, scoped, tag = 'output window, operand 0, single buffered']
    %8 = vsyncpa [#allocation3], 0
    %9 = vsyncpa [#allocation6], 0
    %10 = vsyncpa [#allocation4], 0
    // Predicated region
    $region2: #{tpu_custom_call.1} parent=1 // pred_check
      _
    $region3: #{tpu_custom_call.1} parent=1 // pred_check_branch
      %12 = sbr.rel (0) target = $region5
    $region4: #{tpu_custom_call.1} parent=1 // pred_region
      %s14 = ssub.s32 512, 512
      %15 = vsyncadd [#allocation3], %s14
      %s16 = sshll.u32 [#allocation2], 4
      %s17 = int_to_ptr.vmem [resolvable:$true] %s16
      %22 = dma.hbm_to_vmem [thread:$0]  %s0, 512, %s17, [#allocation3], 256, 256, 16
    $region5: #{tpu_custom_call.1} parent=1 // pred_fallthru
      _
    // Predicated region
    $region6: #{tpu_custom_call.1} parent=1 // pred_check
      _
    $region7: #{tpu_custom_call.1} parent=1 // pred_check_branch
      %24 = sbr.rel (0) target = $region9
    $region8: #{tpu_custom_call.1} parent=1 // pred_region
      %s26 = ssub.s32 3200, 3200
      %27 = vsyncadd [#allocation6], %s26
      %s28 = sshll.u32 [#allocation5], 4
      %s29 = int_to_ptr.vmem [resolvable:$true] %s28
      %34 = dma.hbm_to_vmem [thread:$0]  %s1, 3200, %s29, [#allocation6], 128, 128, 8
    $region9: #{tpu_custom_call.1} parent=1 // pred_fallthru
      _
    // Predicated region
    $region10: #{tpu_custom_call.1} parent=1 // pred_check
      _
    $region11: #{tpu_custom_call.1} parent=1 // pred_check_branch
      %36 = sbr.rel (0) target = $region13
    $region12: #{tpu_custom_call.1} parent=1 // pred_region
      _
    $region13: #{tpu_custom_call.1} parent=1 // pred_fallthru
      _
    // Predicated region
    $region14: #{tpu_custom_call.1} parent=1 // pred_check
      _
    $region15: #{tpu_custom_call.1} parent=1 // pred_check_branch
      %38 = sbr.rel (0) target = $region17
    $region16: #{tpu_custom_call.1} parent=1 // pred_region
      %39 = dma.done [#allocation3], 512
    $region17: #{tpu_custom_call.1} parent=1 // pred_fallthru
      _
    // Predicated region
    $region18: #{tpu_custom_call.1} parent=1 // pred_check
      _
    $region19: #{tpu_custom_call.1} parent=1 // pred_check_branch
      %41 = sbr.rel (0) target = $region21
    $region20: #{tpu_custom_call.1} parent=1 // pred_region
      %42 = dma.done [#allocation6], 3200
    $region21: #{tpu_custom_call.1} parent=1 // pred_fallthru
      _
    %v43 = vld [vmem:[#allocation5] sm:$0xff]
    %v44 = vld [vmem:[#allocation5 + $0x8] sm:$0xff]
    %v45 = vld [vmem:[#allocation5 + $0x10] sm:$0xff]
    %v46 = vld [vmem:[#allocation5 + $0x18] sm:$0xff]
    %v47 = vld [vmem:[#allocation5 + $0x20] sm:$0xff]
    %v48 = vld [vmem:[#allocation5 + $0x28] sm:$0xff]
    %v49 = vld [vmem:[#allocation5 + $0x30] sm:$0xff]
    %v50 = vld [vmem:[#allocation5 + $0x38] sm:$0xff]
    %v51 = vld [vmem:[#allocation5 + $0x40] sm:$0xff]
    %v52 = vld [vmem:[#allocation5 + $0x48] sm:$0xff]
    %v53 = vld [vmem:[#allocation5 + $0x50] sm:$0xff]
    %v54 = vld [vmem:[#allocation5 + $0x58] sm:$0xff]
    %v55 = vld [vmem:[#allocation5 + $0x60] sm:$0xff]
    %v56 = vld [vmem:[#allocation5 + $0x68] sm:$0xff]
    %v57 = vld [vmem:[#allocation5 + $0x70] sm:$0xff]
    %v58 = vld [vmem:[#allocation5 + $0x78] sm:$0xff]
    %v59 = vld [vmem:[#allocation5 + $0x80] sm:$0xff]
    %v60 = vld [vmem:[#allocation5 + $0x88] sm:$0xff]
    %v61 = vld [vmem:[#allocation5 + $0x90] sm:$0xff]
    %v62 = vld [vmem:[#allocation5 + $0x98] sm:$0xff]
    %v63 = vld [vmem:[#allocation5 + $0xa0] sm:$0xff]
    %v64 = vld [vmem:[#allocation5 + $0xa8] sm:$0xff]
    %v65 = vld [vmem:[#allocation5 + $0xb0] sm:$0xff]
    %v66 = vld [vmem:[#allocation5 + $0xb8] sm:$0xff]
    %v67 = vld [vmem:[#allocation5 + $0xc0] sm:$0x3f]
    %v68 = vld [vmem:[%s2] sm:$0x1]
    %v69 = vld [vmem:[#allocation2] sm:$0xff]
    %v70 = vld [vmem:[#allocation2 + $0x8] sm:$0xff]
    %v72 = vlaneseq
    %v73 = vshrl.u32 %v72, 7
    %v74 = vsub.s32 0, %v73
    %v75 = vrot.slane %v68, %v74
    %vm77 = vcmask 572416
    %v79 = vsel %vm77, %v70, 0
    %vm81 = vcmask 1045504
    %v83 = vsel %vm81, %v67, 0
    %85 = vmatprep.subr.mxu0 0.0
    %86 = vmatpush1.msra.mxu0 %v43
    %87 = vmatprep.subr.mxu0 0.0
    %88 = vmatpush1.msra.mxu0 %v44
    %89 = vmatprep.subr.mxu0 0.0
    %90 = vmatpush1.msra.mxu0 %v45
    %91 = vmatprep.subr.mxu0 0.0
    %92 = vmatpush1.msra.mxu0 %v46
    %93 = vmatprep.subr.mxu0 0.0
    %94 = vmatpush1.msra.mxu0 %v47
    %95 = vmatprep.subr.mxu0 0.0
    %96 = vmatpush1.msra.mxu0 %v48
    %97 = vmatprep.subr.mxu0 0.0
    %98 = vmatpush1.msra.mxu0 %v49
    %99 = vmatprep.subr.mxu0 0.0
    %100 = vmatpush1.msra.mxu0 %v50
    %101 = vmatprep.subr.mxu0 0.0
    %102 = vmatpush1.msra.mxu0 %v51
    %103 = vmatprep.subr.mxu0 0.0
    %104 = vmatpush1.msra.mxu0 %v52
    %105 = vmatprep.subr.mxu0 0.0
    %106 = vmatpush1.msra.mxu0 %v53
    %107 = vmatprep.subr.mxu0 0.0
    %108 = vmatpush1.msra.mxu0 %v54
    %109 = vmatprep.subr.mxu0 0.0
    %110 = vmatpush1.msra.mxu0 %v55
    %111 = vmatprep.subr.mxu0 0.0
    %112 = vmatpush1.msra.mxu0 %v56
    %113 = vmatprep.subr.mxu0 0.0
    %114 = vmatpush1.msra.mxu0 %v57
    %115 = vmatprep.subr.mxu0 0.0
    %116 = vmatpush1.msra.mxu0 %v58
    %117 = vmatprep.subr.mxu0 0.0
    %118 = vmatpush1.msra.mxu0 %v59
    %119 = vmatprep.subr.mxu0 0.0
    %120 = vmatpush1.msra.mxu0 %v60
    %121 = vmatprep.subr.mxu0 0.0
    %122 = vmatpush1.msra.mxu0 %v61
    %123 = vmatprep.subr.mxu0 0.0
    %124 = vmatpush1.msra.mxu0 %v62
    %125 = vmatprep.subr.mxu0 0.0
    %126 = vmatpush1.msra.mxu0 %v63
    %127 = vmatprep.subr.mxu0 0.0
    %128 = vmatpush1.msra.mxu0 %v64
    %129 = vmatprep.subr.mxu0 0.0
    %130 = vmatpush1.msra.mxu0 %v65
    %131 = vmatprep.subr.mxu0 0.0
    %132 = vmatpush1.msra.mxu0 %v66
    %133 = vmatprep.subr.mxu0 0.0
    %134 = vmatpush1.msra.mxu0 %v83
    %135 = vmatprep.subr.mxu0 0.0
    %136 = vmatpush1.msra.mxu0 0.0
    %137 = vmatprep.subr.mxu0 0.0
    %138 = vmatpush1.msra.mxu0 0.0
    %139 = vmatprep.subr.mxu0 0.0
    %140 = vmatpush1.msra.mxu0 0.0
    %141 = vmatprep.subr.mxu0 0.0
    %142 = vmatpush1.msra.mxu0 0.0
    %143 = vmatprep.subr.mxu0 0.0
    %144 = vmatpush1.msra.mxu0 0.0
    %145 = vmatprep.subr.mxu0 0.0
    %146 = vmatpush1.msra.mxu0 0.0
    %147 = vmatprep.subr.mxu0 0.0
    %148 = vmatpush1.msra.mxu0 0.0
    %149 = vmatprep.mubr.f32.mxu0 %v79
    %150 = vmatmul.mubr.f32.gmra.mrb[0].mxu0 %v69
    %v151 = vpop.f32.mrb[0].mxu0
    %v152 = vadd.f32 %v75, %v151
    %v153 = vpop.f32.mrb[0].mxu0
    %154 = vdwg.mxu0
    %v156 = vcombine.high %v152, %v152
    %v158 = vunpack.c.l.s4 1966171168
    %v159 = vunpack.c.0.s8 %v158
    %v160 = vlaneseq
    %v161 = vshrl.u32 %v160, 7
    %v162 = vsub.s32 %v159, %v161
    %v163 = vrot.slane %v152, %v162
    %v165 = vunpack.c.l.s4 1966171168
    %v166 = vunpack.c.0.s8 %v165
    %v167 = vlaneseq
    %v168 = vshrl.u32 %v167, 7
    %v169 = vsub.s32 %v166, %v168
    %v170 = vrot.slane %v156, %v169
    %v171 = vcombine.high %v163, %v163
    %v172 = vcombine.high %v170, %v170
    %v174 = vunpack.c.l.s4 1966171168
    %v175 = vunpack.c.0.s8 %v174
    %v176 = vlaneseq
    %v177 = vshrl.u32 %v176, 7
    %v178 = vsub.s32 %v175, %v177
    %v179 = vrot.slane %v163, %v178
    %v181 = vunpack.c.l.s4 1966171168
    %v182 = vunpack.c.0.s8 %v181
    %v183 = vlaneseq
    %v184 = vshrl.u32 %v183, 7
    %v185 = vsub.s32 %v182, %v184
    %v186 = vrot.slane %v170, %v185
    %v188 = vunpack.c.l.s4 1966171168
    %v189 = vunpack.c.0.s8 %v188
    %v190 = vlaneseq
    %v191 = vshrl.u32 %v190, 7
    %v192 = vsub.s32 %v189, %v191
    %v193 = vrot.slane %v171, %v192
    %v195 = vunpack.c.l.s4 1966171168
    %v196 = vunpack.c.0.s8 %v195
    %v197 = vlaneseq
    %v198 = vshrl.u32 %v197, 7
    %v199 = vsub.s32 %v196, %v198
    %v200 = vrot.slane %v172, %v199
    %v201 = vcombine.high %v179, %v179
    %v202 = vcombine.high %v186, %v186
    %v203 = vcombine.high %v193, %v193
    %v204 = vcombine.high %v200, %v200
    %213 = vst [vmem:[#allocation7] sm:$0x1] %v179
    %214 = vst [vmem:[#allocation7 + $0x2] sm:$0x1] %v193
    %215 = vst [vmem:[#allocation7 + $0x4] sm:$0x1] %v201
    %216 = vst [vmem:[#allocation7 + $0x6] sm:$0x1] %v203
    %217 = vst [vmem:[#allocation7 + $0x8] sm:$0x1] %v186
    %218 = vst [vmem:[#allocation7 + $0xa] sm:$0x1] %v200
    %219 = vst [vmem:[#allocation7 + $0xc] sm:$0x1] %v202
    %220 = vst [vmem:[#allocation7 + $0xe] sm:$0x1] %v204
    %s221 = scalar_lea.vmem [#allocation2], 16
    %v222 = vld [vmem:[%s221] sm:$0xff]
    %v223 = vld [vmem:[%s221 + $0x8] sm:$0xff]
    %v225 = vsel %vm77, %v223, 0
    %227 = vmatprep.subr.mxu0 0.0
    %228 = vmatpush1.msra.mxu0 %v43
    %229 = vmatprep.subr.mxu0 0.0
    %230 = vmatpush1.msra.mxu0 %v44
    %231 = vmatprep.subr.mxu0 0.0
    %232 = vmatpush1.msra.mxu0 %v45
    %233 = vmatprep.subr.mxu0 0.0
    %234 = vmatpush1.msra.mxu0 %v46
    %235 = vmatprep.subr.mxu0 0.0
    %236 = vmatpush1.msra.mxu0 %v47
    %237 = vmatprep.subr.mxu0 0.0
    %238 = vmatpush1.msra.mxu0 %v48
    %239 = vmatprep.subr.mxu0 0.0
    %240 = vmatpush1.msra.mxu0 %v49
    %241 = vmatprep.subr.mxu0 0.0
    %242 = vmatpush1.msra.mxu0 %v50
    %243 = vmatprep.subr.mxu0 0.0
    %244 = vmatpush1.msra.mxu0 %v51
    %245 = vmatprep.subr.mxu0 0.0
    %246 = vmatpush1.msra.mxu0 %v52
    %247 = vmatprep.subr.mxu0 0.0
    %248 = vmatpush1.msra.mxu0 %v53
    %249 = vmatprep.subr.mxu0 0.0
    %250 = vmatpush1.msra.mxu0 %v54
    %251 = vmatprep.subr.mxu0 0.0
    %252 = vmatpush1.msra.mxu0 %v55
    %253 = vmatprep.subr.mxu0 0.0
    %254 = vmatpush1.msra.mxu0 %v56
    %255 = vmatprep.subr.mxu0 0.0
    %256 = vmatpush1.msra.mxu0 %v57
    %257 = vmatprep.subr.mxu0 0.0
    %258 = vmatpush1.msra.mxu0 %v58
    %259 = vmatprep.subr.mxu0 0.0
    %260 = vmatpush1.msra.mxu0 %v59
    %261 = vmatprep.subr.mxu0 0.0
    %262 = vmatpush1.msra.mxu0 %v60
    %263 = vmatprep.subr.mxu0 0.0
    %264 = vmatpush1.msra.mxu0 %v61
    %265 = vmatprep.subr.mxu0 0.0
    %266 = vmatpush1.msra.mxu0 %v62
    %267 = vmatprep.subr.mxu0 0.0
    %268 = vmatpush1.msra.mxu0 %v63
    %269 = vmatprep.subr.mxu0 0.0
    %270 = vmatpush1.msra.mxu0 %v64
    %271 = vmatprep.subr.mxu0 0.0
    %272 = vmatpush1.msra.mxu0 %v65
    %273 = vmatprep.subr.mxu0 0.0
    %274 = vmatpush1.msra.mxu0 %v66
    %275 = vmatprep.subr.mxu0 0.0
    %276 = vmatpush1.msra.mxu0 %v83
    %277 = vmatprep.subr.mxu0 0.0
    %278 = vmatpush1.msra.mxu0 0.0
    %279 = vmatprep.subr.mxu0 0.0
    %280 = vmatpush1.msra.mxu0 0.0
    %281 = vmatprep.subr.mxu0 0.0
    %282 = vmatpush1.msra.mxu0 0.0
    %283 = vmatprep.subr.mxu0 0.0
    %284 = vmatpush1.msra.mxu0 0.0
    %285 = vmatprep.subr.mxu0 0.0
    %286 = vmatpush1.msra.mxu0 0.0
    %287 = vmatprep.subr.mxu0 0.0
    %288 = vmatpush1.msra.mxu0 0.0
    %289 = vmatprep.subr.mxu0 0.0
    %290 = vmatpush1.msra.mxu0 0.0
    %291 = vmatprep.mubr.f32.mxu0 %v225
    %292 = vmatmul.mubr.f32.gmra.mrb[0].mxu0 %v222
    %v293 = vpop.f32.mrb[0].mxu0
    %v294 = vadd.f32 %v75, %v293
    %v295 = vpop.f32.mrb[0].mxu0
    %296 = vdwg.mxu0
    %v298 = vcombine.high %v294, %v294
    %v300 = vunpack.c.l.s4 1966171168
    %v301 = vunpack.c.0.s8 %v300
    %v302 = vlaneseq
    %v303 = vshrl.u32 %v302, 7
    %v304 = vsub.s32 %v301, %v303
    %v305 = vrot.slane %v294, %v304
    %v307 = vunpack.c.l.s4 1966171168
    %v308 = vunpack.c.0.s8 %v307
    %v309 = vlaneseq
    %v310 = vshrl.u32 %v309, 7
    %v311 = vsub.s32 %v308, %v310
    %v312 = vrot.slane %v298, %v311
    %v313 = vcombine.high %v305, %v305
    %v314 = vcombine.high %v312, %v312
    %v316 = vunpack.c.l.s4 1966171168
    %v317 = vunpack.c.0.s8 %v316
    %v318 = vlaneseq
    %v319 = vshrl.u32 %v318, 7
    %v320 = vsub.s32 %v317, %v319
    %v321 = vrot.slane %v305, %v320
    %v323 = vunpack.c.l.s4 1966171168
    %v324 = vunpack.c.0.s8 %v323
    %v325 = vlaneseq
    %v326 = vshrl.u32 %v325, 7
    %v327 = vsub.s32 %v324, %v326
    %v328 = vrot.slane %v312, %v327
    %v330 = vunpack.c.l.s4 1966171168
    %v331 = vunpack.c.0.s8 %v330
    %v332 = vlaneseq
    %v333 = vshrl.u32 %v332, 7
    %v334 = vsub.s32 %v331, %v333
    %v335 = vrot.slane %v313, %v334
    %v337 = vunpack.c.l.s4 1966171168
    %v338 = vunpack.c.0.s8 %v337
    %v339 = vlaneseq
    %v340 = vshrl.u32 %v339, 7
    %v341 = vsub.s32 %v338, %v340
    %v342 = vrot.slane %v314, %v341
    %v343 = vcombine.high %v321, %v321
    %v344 = vcombine.high %v328, %v328
    %v345 = vcombine.high %v335, %v335
    %v346 = vcombine.high %v342, %v342
    %355 = vst [vmem:[#allocation7 + $0x1] sm:$0x1] %v321
    %356 = vst [vmem:[#allocation7 + $0x3] sm:$0x1] %v335
    %357 = vst [vmem:[#allocation7 + $0x5] sm:$0x1] %v343
    %358 = vst [vmem:[#allocation7 + $0x7] sm:$0x1] %v345
    %359 = vst [vmem:[#allocation7 + $0x9] sm:$0x1] %v328
    %360 = vst [vmem:[#allocation7 + $0xb] sm:$0x1] %v342
    %361 = vst [vmem:[#allocation7 + $0xd] sm:$0x1] %v344
    %362 = vst [vmem:[#allocation7 + $0xf] sm:$0x1] %v346
    // Predicated region
    $region22: #{tpu_custom_call.1} parent=1 // pred_check
      _
    $region23: #{tpu_custom_call.1} parent=1 // pred_check_branch
      %364 = sbr.rel (0) target = $region25
    $region24: #{tpu_custom_call.1} parent=1 // pred_region
      %s366 = ssub.s32 256, 256
      %367 = vsyncadd [#allocation4], %s366
      %s368 = sshll.u32 [#allocation7], 4
      %s369 = int_to_ptr.vmem [resolvable:$true] %s368
      %374 = dma.vmem_to_hbm [thread:$0]  %s369, 256, %s3, [#allocation4], 32, 32, 2
    $region25: #{tpu_custom_call.1} parent=1 // pred_fallthru
      _
    // Predicated region
    $region26: #{tpu_custom_call.1} parent=1 // pred_check
      _
    $region27: #{tpu_custom_call.1} parent=1 // pred_check_branch
      %376 = sbr.rel (0) target = $region29
    $region28: #{tpu_custom_call.1} parent=1 // pred_region
      %377 = dma.done [#allocation4], 256
    $region29: #{tpu_custom_call.1} parent=1 // pred_fallthru
      _
    %378 = vsyncpa [#allocation3], 1
    %379 = vsyncpa [#allocation6], 1
    %380 = vsyncpa [#allocation4], 1

</llo_original>
